<compile_context>
chip_gen: v5e
topology: v5e:2x2
jax: 0.10.0
libtpu: 0.0.40
codegen_flags: <defaults>
</compile_context>

<pallas_src>
import functools

import jax
import jax.numpy as jnp
from jax.experimental import pallas as pl
from jax.experimental.pallas import tpu as pltpu

# ----------------------------- model dims -----------------------------------
VOCAB = 64   # token vocabulary
N_SRC = 4    # number of distinct sources (Source_num values)
B = 2        # batch
L = 16       # sequence length
D = 32       # hidden / embedding width
F = 8        # Feature_seq feature width
K_SHORT = 3  # short depthwise conv kernel size


# ------------------------------ kernel ---------------------------------------
def hyena_token0_kernel(emb0_ref, src_ref, feat0_ref,
                        w_in_ref, w_feat_in_ref, b_in_ref,
                        w_short0_ref, h0_ref,
                        w_out_ref, b_out_ref,
                        out_ref, *, dim):
    """Single-program token-0 path for the whole batch.

    Shapes: emb0/src [B, D], feat0 [B, F], w_in [D, 3D], w_feat_in [F, 3D],
    b_in/w_short0 [1, 3D], h0 [1, D], w_out [D, D], b_out [1, D], out [B, D].
    """
    # Embedding + source embedding (the feature projection is folded into
    # w_feat_in, so the two matmuls below are independent, not chained).
    x0 = emb0_ref[...] + src_ref[...]                                  # [B, D]

    # In-projection to (v, x1, x2) at position 0.
    u0 = (jnp.dot(x0, w_in_ref[...], preferred_element_type=jnp.float32)
          + jnp.dot(feat0_ref[...], w_feat_in_ref[...],
                    preferred_element_type=jnp.float32)
          + b_in_ref[...])                                             # [B, 3D]

    # Short causal depthwise conv at t=0: only the k=0 tap contributes
    # (left padding is zero).
    uc0 = u0 * w_short0_ref[...]                                       # [B, 3D]

    v0 = uc0[:, 0:dim]
    x1 = uc0[:, dim:2 * dim]
    x2 = uc0[:, 2 * dim:3 * dim]

    # Gate -> long causal per-channel conv at t=0 (only the s=0 tap, h[0])
    # -> second gate.
    y0 = (v0 * x1) * h0_ref[...] * x2                                  # [B, D]

    # Out-projection; lane-dense [B, D] store.
    out_ref[...] = (jnp.dot(y0, w_out_ref[...],
                            preferred_element_type=jnp.float32)
                    + b_out_ref[...])


# ------------------------------ wrapper ---------------------------------------
def hyena_morph_forward(input_ids, feature_seq, source_num, params):
    """input_ids [B, L] int32, feature_seq [B, L, F], source_num [B] int32."""
    feature_seq = feature_seq.astype(jnp.float32)  # Feature_seq.clone().to(float32)

    # Token-0 dead-code elimination: only position-0 inputs are live.
    emb0 = params["emb_table"][input_ids[:, 0]]                   # [B, D]
    src = params["src_table"][source_num]                         # [B, D]
    feat0 = feature_seq[:, 0, :]                                  # [B, F]

    # Fold the feature projection into the in-projection ([F,D]@[D,3D] once,
    # outside the kernel): u0 = (emb0+src)@w_in + feat0@w_feat_in + b_in.
    w_feat_in = jnp.dot(params["w_feat"], params["w_in"],
                        preferred_element_type=jnp.float32,
                        precision=jax.lax.Precision.HIGHEST)      # [F, 3D]

    # Only the zero-lag taps of the convolutions are live at t=0.
    w_short0 = params["w_short"][0:1]                             # [1, 3D]
    h0 = params["h_long"][0:1]                                    # [1, D]

    kernel = functools.partial(hyena_token0_kernel, dim=D)
    vmem = functools.partial(pl.BlockSpec, memory_space=pltpu.MemorySpace.VMEM)

    # Single program, no grid: every operand is tiny and lives fully in VMEM;
    # the whole batch is processed as one [B, D] slab.
    out = pl.pallas_call(
        kernel,
        out_shape=jax.ShapeDtypeStruct((B, D), jnp.float32),
        in_specs=[vmem()] * 10,
        out_specs=vmem(),
    )(emb0, src, feat0,
      params["w_in"], w_feat_in, params["b_in"],
      w_short0, h0, params["w_out"], params["b_out"])

    return out                                                    # [B, D]


# --------------------- full-sequence reference (pure JAX) ---------------------
def hyena_reference(input_ids, feature_seq, source_num, params):
    """Unsimplified full-sequence forward; returns token 0 of the output."""
    hp = jax.lax.Precision.HIGHEST
    feature_seq = feature_seq.astype(jnp.float32)
    emb = params["emb_table"][input_ids]                          # [B, L, D]
    src = params["src_table"][source_num][:, None, :]             # [B, 1, D]
    x = emb + jnp.einsum("blf,fd->bld", feature_seq, params["w_feat"],
                         precision=hp) + src
    u = jnp.einsum("bld,de->ble", x, params["w_in"], precision=hp)
    u = u + params["b_in"]                                        # [B, L, 3D]

    # Short causal depthwise conv (zero left padding).
    uc = u * params["w_short"][0]
    for j in range(1, K_SHORT):
        shifted = jnp.pad(u, ((0, 0), (j, 0), (0, 0)))[:, :L, :]
        uc = uc + shifted * params["w_short"][j]

    v, x1, x2 = uc[..., :D], uc[..., D:2 * D], uc[..., 2 * D:]
    z = v * x1

    # Long causal per-channel conv with explicit filter h[L, D].
    h = params["h_long"]
    y = z * h[0]
    for s in range(1, L):
        shifted = jnp.pad(z, ((0, 0), (s, 0), (0, 0)))[:, :L, :]
        y = y + shifted * h[s]

    y = y * x2
    out = jnp.einsum("bld,de->ble", y, params["w_out"], precision=hp)
    out = out + params["b_out"]
    return out[:, 0, :]                                           # [B, D]


# ------------------------- deterministic params -------------------------------
def init_params(key):
    ks = jax.random.split(key, 7)
    s = 0.5
    return {
        "emb_table": s * jax.random.normal(ks[0], (VOCAB, D), jnp.float32),
        "src_table": s * jax.random.normal(ks[1], (N_SRC, D), jnp.float32),
        "w_feat":    s * jax.random.normal(ks[2], (F, D), jnp.float32),
        "w_in":      s * jax.random.normal(ks[3], (D, 3 * D), jnp.float32),
        "b_in":      jnp.zeros((1, 3 * D), jnp.float32),
        "w_short":   s * jax.random.normal(ks[4], (K_SHORT, 3 * D), jnp.float32),
        "h_long":    s * jax.random.normal(ks[5], (L, D), jnp.float32),
        "w_out":     s * jax.random.normal(ks[6], (D, D), jnp.float32),
        "b_out":     jnp.zeros((1, D), jnp.float32),
    }


if __name__ == "__main__":
    key = jax.random.PRNGKey(0)
    k_ids, k_feat, k_src, k_par = jax.random.split(key, 4)

    input_ids = jax.random.randint(k_ids, (B, L), 0, VOCAB, dtype=jnp.int32)
    feature_seq = jax.random.normal(k_feat, (B, L, F), jnp.float32)
    source_num = jax.random.randint(k_src, (B,), 0, N_SRC, dtype=jnp.int32)

    params = init_params(k_par)

    ctx = jax.jit(hyena_morph_forward)(input_ids, feature_seq, source_num, params)
    jax.block_until_ready(ctx)
    assert ctx.shape == (B, D)

    # The token-0 simplification must match the full-sequence forward exactly
    # (up to MXU/f32-pass rounding differences).
    ref = hyena_reference(input_ids, feature_seq, source_num, params)
    assert bool(jnp.allclose(ctx, ref, rtol=2e-2, atol=2e-2)), \
        "kernel vs full-sequence reference mismatch"

    print("KERNEL_OK")
</pallas_src>

<mosaic_0001>
module attributes {stable_mosaic.version = 11 : i64} {
  func.func @hyena_token0_kernel(%arg0: memref<2x32xf32, #tpu.memory_space<vmem>>, %arg1: memref<2x32xf32, #tpu.memory_space<vmem>>, %arg2: memref<2x8xf32, #tpu.memory_space<vmem>>, %arg3: memref<32x96xf32, #tpu.memory_space<vmem>>, %arg4: memref<8x96xf32, #tpu.memory_space<vmem>>, %arg5: memref<1x96xf32, #tpu.memory_space<vmem>>, %arg6: memref<1x96xf32, #tpu.memory_space<vmem>>, %arg7: memref<1x32xf32, #tpu.memory_space<vmem>>, %arg8: memref<32x32xf32, #tpu.memory_space<vmem>>, %arg9: memref<1x32xf32, #tpu.memory_space<vmem>>, %arg10: memref<2x32xf32, #tpu.memory_space<vmem>>) attributes {dimension_semantics = [], scalar_prefetch = 0 : i64, scratch_operands = 0 : i64, tpu.core_type = #tpu.core_type<tc>} {
    %c0 = arith.constant 0 : index
    %c0_0 = arith.constant 0 : index
    %0 = vector.load %arg0[%c0, %c0_0] : memref<2x32xf32, #tpu.memory_space<vmem>>, vector<2x32xf32>
    %c0_1 = arith.constant 0 : index
    %c0_2 = arith.constant 0 : index
    %1 = vector.load %arg1[%c0_1, %c0_2] : memref<2x32xf32, #tpu.memory_space<vmem>>, vector<2x32xf32>
    %2 = arith.addf %0, %1 : vector<2x32xf32>
    %c0_3 = arith.constant 0 : index
    %c0_4 = arith.constant 0 : index
    %3 = vector.load %arg3[%c0_3, %c0_4] : memref<32x96xf32, #tpu.memory_space<vmem>>, vector<32x96xf32>
    %cst = arith.constant dense<0.000000e+00> : vector<2x96xf32>
    %4 = tpu.matmul %2, %3, %cst {dimension_numbers = #tpu.dot_dimension_numbers<[1], [0], [0], [1], [0, 0, 1, 1], [], []>} : vector<2x32xf32>, vector<32x96xf32>, vector<2x96xf32> -> vector<2x96xf32>
    %c0_5 = arith.constant 0 : index
    %c0_6 = arith.constant 0 : index
    %5 = vector.load %arg2[%c0_5, %c0_6] : memref<2x8xf32, #tpu.memory_space<vmem>>, vector<2x8xf32>
    %c0_7 = arith.constant 0 : index
    %c0_8 = arith.constant 0 : index
    %6 = vector.load %arg4[%c0_7, %c0_8] : memref<8x96xf32, #tpu.memory_space<vmem>>, vector<8x96xf32>
    %cst_9 = arith.constant dense<0.000000e+00> : vector<2x96xf32>
    %7 = tpu.matmul %5, %6, %cst_9 {dimension_numbers = #tpu.dot_dimension_numbers<[1], [0], [0], [1], [0, 0, 1, 1], [], []>} : vector<2x8xf32>, vector<8x96xf32>, vector<2x96xf32> -> vector<2x96xf32>
    %8 = arith.addf %4, %7 : vector<2x96xf32>
    %c0_10 = arith.constant 0 : index
    %c0_11 = arith.constant 0 : index
    %9 = vector.load %arg5[%c0_10, %c0_11] : memref<1x96xf32, #tpu.memory_space<vmem>>, vector<1x96xf32>
    %10 = vector.broadcast %9 : vector<1x96xf32> to vector<2x96xf32>
    %11 = arith.addf %8, %10 : vector<2x96xf32>
    %c0_12 = arith.constant 0 : index
    %c0_13 = arith.constant 0 : index
    %12 = vector.load %arg6[%c0_12, %c0_13] : memref<1x96xf32, #tpu.memory_space<vmem>>, vector<1x96xf32>
    %13 = vector.broadcast %12 : vector<1x96xf32> to vector<2x96xf32>
    %14 = arith.mulf %11, %13 : vector<2x96xf32>
    %15 = vector.extract_strided_slice %14 {offsets = [0, 0], sizes = [2, 32], strides = [1, 1]} : vector<2x96xf32> to vector<2x32xf32>
    %16 = vector.extract_strided_slice %14 {offsets = [0, 32], sizes = [2, 32], strides = [1, 1]} : vector<2x96xf32> to vector<2x32xf32>
    %17 = vector.extract_strided_slice %14 {offsets = [0, 64], sizes = [2, 32], strides = [1, 1]} : vector<2x96xf32> to vector<2x32xf32>
    %18 = arith.mulf %15, %16 : vector<2x32xf32>
    %c0_14 = arith.constant 0 : index
    %c0_15 = arith.constant 0 : index
    %19 = vector.load %arg7[%c0_14, %c0_15] : memref<1x32xf32, #tpu.memory_space<vmem>>, vector<1x32xf32>
    %20 = vector.broadcast %19 : vector<1x32xf32> to vector<2x32xf32>
    %21 = arith.mulf %18, %20 : vector<2x32xf32>
    %22 = arith.mulf %21, %17 : vector<2x32xf32>
    %c0_16 = arith.constant 0 : index
    %c0_17 = arith.constant 0 : index
    %23 = vector.load %arg8[%c0_16, %c0_17] : memref<32x32xf32, #tpu.memory_space<vmem>>, vector<32x32xf32>
    %cst_18 = arith.constant dense<0.000000e+00> : vector<2x32xf32>
    %24 = tpu.matmul %22, %23, %cst_18 {dimension_numbers = #tpu.dot_dimension_numbers<[1], [0], [0], [1], [0, 0, 1, 1], [], []>} : vector<2x32xf32>, vector<32x32xf32>, vector<2x32xf32> -> vector<2x32xf32>
    %c0_19 = arith.constant 0 : index
    %c0_20 = arith.constant 0 : index
    %25 = vector.load %arg9[%c0_19, %c0_20] : memref<1x32xf32, #tpu.memory_space<vmem>>, vector<1x32xf32>
    %26 = vector.broadcast %25 : vector<1x32xf32> to vector<2x32xf32>
    %27 = arith.addf %24, %26 : vector<2x32xf32>
    %c0_21 = arith.constant 0 : index
    %c0_22 = arith.constant 0 : index
    %28 = vector.load %arg10[%c0_21, %c0_22] : memref<2x32xf32, #tpu.memory_space<vmem>>, vector<2x32xf32>
    tpu.vector_store %arg10[%c0_21, %c0_22], %27 {strides = array<i32>} : memref<2x32xf32, #tpu.memory_space<vmem>>, vector<2x32xf32>,
    return
  }
}

</mosaic_0001>

<llo_original>
// kernel: hyena_morph_forward.1
$region0: #{hyena_morph_forward.1}
  #allocation0 [shape = 'u32[]', space=smem, size = 0x4, offset = 0x4, fixed_abs, tag = 'smem constant byte address 0x4 - core index']
  #allocation1 [shape = 'u32[72,128]{1,0:T(1,128)}', space=vmem, size = 0x9000, scoped, tag = 'internal scratch']
  %s0 = inlined_call_operand.vmem [shape: f32[2,32], index: 0, kind: input, shape index: {}]
  %s1 = inlined_call_operand.vmem [shape: f32[2,32], index: 1, kind: input, shape index: {}]
  %s2 = inlined_call_operand.vmem [shape: f32[2,8], index: 2, kind: input, shape index: {}]
  %s3 = inlined_call_operand.vmem [shape: f32[32,96], index: 3, kind: input, shape index: {}]
  %s4 = inlined_call_operand.vmem [shape: f32[8,96], index: 4, kind: input, shape index: {}]
  %s5 = inlined_call_operand.vmem [shape: f32[1,96], index: 5, kind: input, shape index: {}]
  %s6 = inlined_call_operand.vmem [shape: f32[1,96], index: 6, kind: input, shape index: {}]
  %s7 = inlined_call_operand.vmem [shape: f32[1,32], index: 7, kind: input, shape index: {}]
  %s8 = inlined_call_operand.vmem [shape: f32[32,32], index: 8, kind: input, shape index: {}]
  %s9 = inlined_call_operand.vmem [shape: f32[1,32], index: 9, kind: input, shape index: {}]
  %s10 = inlined_call_operand.hbm [shape: f32[2,32], index: 10, kind: output, shape index: {}]
  %s11 = sld [smem:[#allocation0]]
  $region50: #{hyena_morph_forward.1} parent=0
    _
  %s13 = ssub.s32 1, %s11
  %s14 = scalar_select 0, %s13, %s11
  $region1: #{hyena_morph_forward.1} parent=0
    #allocation2 [shape = 'u8[1024]{0}', space=vmem, size = 0x400, scoped, tag = 'output window, operand 0, single buffered']
    #allocation3 [shape = 's32[1]{0}', space=sflag, size = 0x4, scoped, tag = 'scoped memory for hyena_morph_forward.1']
    %15 = vsyncpa [#allocation3], 0
    // Predicated region
    $region2: #{hyena_morph_forward.1} parent=1 // pred_check
      _
    $region3: #{hyena_morph_forward.1} parent=1 // pred_check_branch
      %17 = sbr.rel (0) target = $region5
    $region4: #{hyena_morph_forward.1} parent=1 // pred_region
      _
    $region5: #{hyena_morph_forward.1} parent=1 // pred_fallthru
      _
    // Predicated region
    $region6: #{hyena_morph_forward.1} parent=1 // pred_check
      _
    $region7: #{hyena_morph_forward.1} parent=1 // pred_check_branch
      %19 = sbr.rel (0) target = $region9
    $region8: #{hyena_morph_forward.1} parent=1 // pred_region
      _
    $region9: #{hyena_morph_forward.1} parent=1 // pred_fallthru
      _
    // Predicated region
    $region10: #{hyena_morph_forward.1} parent=1 // pred_check
      _
    $region11: #{hyena_morph_forward.1} parent=1 // pred_check_branch
      %21 = sbr.rel (0) target = $region13
    $region12: #{hyena_morph_forward.1} parent=1 // pred_region
      _
    $region13: #{hyena_morph_forward.1} parent=1 // pred_fallthru
      _
    // Predicated region
    $region14: #{hyena_morph_forward.1} parent=1 // pred_check
      _
    $region15: #{hyena_morph_forward.1} parent=1 // pred_check_branch
      %23 = sbr.rel (0) target = $region17
    $region16: #{hyena_morph_forward.1} parent=1 // pred_region
      _
    $region17: #{hyena_morph_forward.1} parent=1 // pred_fallthru
      _
    // Predicated region
    $region18: #{hyena_morph_forward.1} parent=1 // pred_check
      _
    $region19: #{hyena_morph_forward.1} parent=1 // pred_check_branch
      %25 = sbr.rel (0) target = $region21
    $region20: #{hyena_morph_forward.1} parent=1 // pred_region
      _
    $region21: #{hyena_morph_forward.1} parent=1 // pred_fallthru
      _
    // Predicated region
    $region22: #{hyena_morph_forward.1} parent=1 // pred_check
      _
    $region23: #{hyena_morph_forward.1} parent=1 // pred_check_branch
      %27 = sbr.rel (0) target = $region25
    $region24: #{hyena_morph_forward.1} parent=1 // pred_region
      _
    $region25: #{hyena_morph_forward.1} parent=1 // pred_fallthru
      _
    // Predicated region
    $region26: #{hyena_morph_forward.1} parent=1 // pred_check
      _
    $region27: #{hyena_morph_forward.1} parent=1 // pred_check_branch
      %29 = sbr.rel (0) target = $region29
    $region28: #{hyena_morph_forward.1} parent=1 // pred_region
      _
    $region29: #{hyena_morph_forward.1} parent=1 // pred_fallthru
      _
    // Predicated region
    $region30: #{hyena_morph_forward.1} parent=1 // pred_check
      _
    $region31: #{hyena_morph_forward.1} parent=1 // pred_check_branch
      %31 = sbr.rel (0) target = $region33
    $region32: #{hyena_morph_forward.1} parent=1 // pred_region
      _
    $region33: #{hyena_morph_forward.1} parent=1 // pred_fallthru
      _
    // Predicated region
    $region34: #{hyena_morph_forward.1} parent=1 // pred_check
      _
    $region35: #{hyena_morph_forward.1} parent=1 // pred_check_branch
      %33 = sbr.rel (0) target = $region37
    $region36: #{hyena_morph_forward.1} parent=1 // pred_region
      _
    $region37: #{hyena_morph_forward.1} parent=1 // pred_fallthru
      _
    // Predicated region
    $region38: #{hyena_morph_forward.1} parent=1 // pred_check
      _
    $region39: #{hyena_morph_forward.1} parent=1 // pred_check_branch
      %35 = sbr.rel (0) target = $region41
    $region40: #{hyena_morph_forward.1} parent=1 // pred_region
      _
    $region41: #{hyena_morph_forward.1} parent=1 // pred_fallthru
      _
    %v36 = vld [vmem:[%s0] sm:$0x3]
    %v37 = vld [vmem:[%s1] sm:$0x3]
    %v38 = vadd.f32 %v36, %v37
    %v39 = vld [vmem:[%s3] sm:$0xff]
    %v40 = vld [vmem:[%s3 + $0x8] sm:$0xff]
    %v41 = vld [vmem:[%s3 + $0x10] sm:$0xff]
    %v42 = vld [vmem:[%s3 + $0x18] sm:$0xff]
    %v43 = vld [vmem:[%s2] sm:$0x3]
    %v44 = vld [vmem:[%s4] sm:$0xff]
    %vm45 = vcmask 64512
    %v47 = vsel %vm45, %v43, 0
    %49 = vmatpush.msra.mxu0 0.0
    %50 = vmatpush.msra.mxu0 0.0
    %51 = vmatpush.msra.mxu0 0.0
    %52 = vmatpush.msra.mxu0 0.0
    %53 = vmatpush.msra.mxu0 0.0
    %54 = vmatpush.msra.mxu0 0.0
    %55 = vmatpush.msra.mxu0 0.0
    %56 = vmatpush.msra.mxu0 0.0
    %57 = vmatpush.msra.mxu0 0.0
    %58 = vmatpush.msra.mxu0 0.0
    %59 = vmatpush.msra.mxu0 0.0
    %60 = vmatpush.msra.mxu0 0.0
    %61 = vmatpush.msra.mxu0 0.0
    %62 = vmatpush.msra.mxu0 0.0
    %63 = vmatpush.msra.mxu0 0.0
    %64 = vmatpush.msra.mxu0 %v44
    %65 = vmatmul.f32.gmra.mxu0 %v47
    %v66 = vpop.f32.mrf.mxu0
    %v67 = vadd.f32 0.0, %v66
    %68 = vdwg.mxu0
    %vm69 = vcmask 261120
    %v71 = vsel %vm69, %v38, 0
    %73 = vmatpush.msra.mxu0 0.0
    %74 = vmatpush.msra.mxu0 0.0
    %75 = vmatpush.msra.mxu0 0.0
    %76 = vmatpush.msra.mxu0 0.0
    %77 = vmatpush.msra.mxu0 0.0
    %78 = vmatpush.msra.mxu0 0.0
    %79 = vmatpush.msra.mxu0 0.0
    %80 = vmatpush.msra.mxu0 0.0
    %81 = vmatpush.msra.mxu0 0.0
    %82 = vmatpush.msra.mxu0 0.0
    %83 = vmatpush.msra.mxu0 0.0
    %84 = vmatpush.msra.mxu0 0.0
    %85 = vmatpush.msra.mxu0 %v42
    %86 = vmatpush.msra.mxu0 %v41
    %87 = vmatpush.msra.mxu0 %v40
    %88 = vmatpush.msra.mxu0 %v39
    %89 = vmatmul.f32.gmra.mxu0 %v71
    %v90 = vpop.f32.mrf.mxu0
    %v91 = vadd.f32 %v67, %v90
    %92 = vdwg.mxu0
    %v93 = vld [vmem:[%s5] sm:$0x1]
    %v95 = vperm.slane %v93, 0
    %v97 = vadd.f32 %v91, %v95
    %v98 = vld [vmem:[%s6] sm:$0x1]
    %v100 = vperm.slane %v98, 0
    %v102 = vmul.f32 %v97, %v100
    %104 = vrot.lane.b32.xlu0 %v102, 96
    %v105 = vpop.permute.xlu0 %104
    %v107 = vmul.f32 %v102, %v105
    %v108 = vld [vmem:[%s7] sm:$0x1]
    %v110 = vperm.slane %v108, 0
    %v112 = vmul.f32 %v107, %v110
    %113 = vrot.lane.b32.xlu0 %v102, 64
    %v114 = vpop.permute.xlu0 %113
    %v116 = vmul.f32 %v112, %v114
    %v117 = vld [vmem:[%s8] sm:$0xff]
    %v118 = vld [vmem:[%s8 + $0x8] sm:$0xff]
    %v119 = vld [vmem:[%s8 + $0x10] sm:$0xff]
    %v120 = vld [vmem:[%s8 + $0x18] sm:$0xff]
    %v121 = vld [vmem:[%s9] sm:$0x1]
    %v123 = vperm.slane %v121, 0
    %v126 = vsel %vm69, %v116, 0
    %128 = vmatpush.msra.mxu0 0.0
    %129 = vmatpush.msra.mxu0 0.0
    %130 = vmatpush.msra.mxu0 0.0
    %131 = vmatpush.msra.mxu0 0.0
    %132 = vmatpush.msra.mxu0 0.0
    %133 = vmatpush.msra.mxu0 0.0
    %134 = vmatpush.msra.mxu0 0.0
    %135 = vmatpush.msra.mxu0 0.0
    %136 = vmatpush.msra.mxu0 0.0
    %137 = vmatpush.msra.mxu0 0.0
    %138 = vmatpush.msra.mxu0 0.0
    %139 = vmatpush.msra.mxu0 0.0
    %140 = vmatpush.msra.mxu0 %v120
    %141 = vmatpush.msra.mxu0 %v119
    %142 = vmatpush.msra.mxu0 %v118
    %143 = vmatpush.msra.mxu0 %v117
    %144 = vmatmul.f32.gmra.mxu0 %v126
    %v145 = vpop.f32.mrf.mxu0
    %v146 = vadd.f32 %v123, %v145
    %147 = vdwg.mxu0
    %vm148 = vcmask 254976
    %149 = vst.msk [vmem:[#allocation2] sm:$0x3] %vm148, %v146
    // Predicated region
    $region42: #{hyena_morph_forward.1} parent=1 // pred_check
      _
    $region43: #{hyena_morph_forward.1} parent=1 // pred_check_branch
      %151 = sbr.rel (0) target = $region45
    $region44: #{hyena_morph_forward.1} parent=1 // pred_region
      %153 = vsyncadd [#allocation3], 0
      %s155 = sshll.u32 [#allocation2], 4
      %s156 = int_to_ptr.vmem [resolvable:$true] %s155
      %s157 = sshll.u32 %s10, 4
      %s158 = int_to_ptr.hbm [resolvable:$true] %s157
      %160 = dma.vmem_to_hbm [thread:$0]  %s156, 32, %s158, [#allocation3]
    $region45: #{hyena_morph_forward.1} parent=1 // pred_fallthru
      _
    // Predicated region
    $region46: #{hyena_morph_forward.1} parent=1 // pred_check
      _
    $region47: #{hyena_morph_forward.1} parent=1 // pred_check_branch
      %162 = sbr.rel (0) target = $region49
    $region48: #{hyena_morph_forward.1} parent=1 // pred_region
      %164 = dma.done [#allocation3], 32
    $region49: #{hyena_morph_forward.1} parent=1 // pred_fallthru
      _
    %165 = vsyncpa [#allocation3], 1

</llo_original>
